<compile_context>
chip_gen: v7x
topology: tpu7x:2x2x1
jax: 0.10.0
libtpu: 0.0.40
codegen_flags: <defaults>
</compile_context>

<pallas_src>
import math

import jax
import jax.numpy as jnp
from jax.experimental import pallas as pl
from jax.experimental.pallas import tpu as pltpu

_EPS = 1e-7


# ----------------------------------------------------------------------------- kernels

def _xent_block(p_ref, q_ref):
    """-sum_c (p+eps)*log(q+eps) over the channel axis of a (1, C, S, 128) block."""
    C = p_ref.shape[1]
    c_chunk = C if C <= 64 else 32        # bound live f32 temporaries for large C
    acc = None
    for c0 in range(0, C, c_chunk):
        cc = min(c_chunk, C - c0)
        if cc == C:
            p = p_ref[...]
            q = q_ref[...]
        else:
            p = p_ref[:, c0:c0 + cc]
            q = q_ref[:, c0:c0 + cc]
        p = p.astype(jnp.float32) + _EPS
        q = q.astype(jnp.float32) + _EPS
        part = jnp.sum(-p * jnp.log(q), axis=1)          # (1, S, 128): VALU adds + EUP log
        acc = part if acc is None else acc + part
    return acc                                            # (1, S, 128) f32


def _xent_map_kernel(p_ref, q_ref, o_ref):
    # p/q block: (1, C, S, 128); o block: (1, S, 128)
    o_ref[...] = _xent_block(p_ref, q_ref).astype(o_ref.dtype)


def _xent_sum_kernel(p_ref, q_ref, o_ref):
    # p/q block: (1, C, S, 128); o block: (1, 1, 128) accumulator, resident across r.
    part = jnp.sum(_xent_block(p_ref, q_ref), axis=1, keepdims=True)   # (1, 1, 128)

    @pl.when(pl.program_id(1) == 0)
    def _():
        o_ref[...] = jnp.zeros_like(o_ref)

    o_ref[...] += part


# ----------------------------------------------------------------------------- tiling

def _vmem_budget_bytes():
    """Per-generation scoped-VMEM budget (conservative fallback works on v5e/v6e/v7x)."""
    phys = 64 << 20                                   # v7x physical VMEM per TensorCore
    try:
        info = pltpu.get_tpu_info()
        phys = int(getattr(info, "vmem_capacity_bytes", phys))
    except Exception:
        pass
    # Leave headroom for the compiler / framework scratch.
    return max(32 << 20, min(phys - (16 << 20), (3 * phys) // 4))


def _pick_tile(R, B, C, in_bytes, budget_bytes):
    """Pick the sublane-row tile s_tile and the padded row count Rp."""
    granule = 8 if in_bytes >= 4 else (16 if in_bytes >= 2 else 32)   # sublane packing
    # Per-input block budget: 2 inputs x 2 pipeline buffers + f32 temps + output bufs
    # -> keep one input block <= budget/16, clamped to the ~1-4 MiB HBM-roofline sweet spot.
    per_block = min(4 << 20, max(64 << 10, budget_bytes // 16))
    row_bytes = C * 128 * in_bytes
    max_rows = per_block // max(row_bytes, 1)
    max_rows = max(granule, (max_rows // granule) * granule)
    max_rows = min(max_rows, 512)

    if R <= granule:
        return R, R                      # block dim == full array dim: legal, no padding
    if R <= max_rows:
        s = -(-R // granule) * granule   # round up to the granule; pad < granule rows
    else:
        s = max_rows
    # v7x megacore: keep >= 2 grid steps when the batch axis is degenerate.
    if B == 1:
        while s > granule and -(-R // s) < 2:
            s = max(granule, ((s // 2) // granule) * granule)
    Rp = -(-R // s) * s
    return s, Rp


# ----------------------------------------------------------------------------- wrapper

def soft_prob_cross_entropy(target_probs, query_probs, dim=1, reduction='mean'):
    """Pallas implementation of SoftProbCrossEntropy.forward."""
    assert target_probs.shape == query_probs.shape, "shape mismatch"
    if reduction not in ('mean', 'sum', 'none'):
        raise ValueError(f"unknown reduction: {reduction!r}")

    shape = target_probs.shape
    ndim = len(shape)
    dim = dim % ndim

    C = shape[dim]
    B = math.prod(shape[:dim])           # prod(()) == 1
    L = math.prod(shape[dim + 1:])

    out_dtype = jnp.result_type(target_probs.dtype, query_probs.dtype)
    in_bytes = max(jnp.dtype(target_probs.dtype).itemsize,
                   jnp.dtype(query_probs.dtype).itemsize)

    p3 = target_probs.reshape(B, C, L)
    q3 = query_probs.reshape(B, C, L)

    R = -(-L // 128)                                    # rows of 128 lanes
    budget = _vmem_budget_bytes()
    s_tile, Rp = _pick_tile(R, B, C, in_bytes, budget)
    Lp = Rp * 128

    if Lp != L:
        # Pad the trailing axis once (lane remainder + row-tile remainder together).
        # p -> 0, q -> 1.0 so padded elements contribute ~eps*log(1+eps) ~ 1e-14.
        pad = Lp - L
        p3 = jnp.pad(p3, ((0, 0), (0, 0), (0, pad)))
        q3 = jnp.pad(q3, ((0, 0), (0, 0), (0, pad)), constant_values=1.0)

    p4 = p3.reshape(B, C, Rp, 128)
    q4 = q3.reshape(B, C, Rp, 128)

    n_r = Rp // s_tile
    grid = (B, n_r)
    elems = B * C * Rp * 128

    in_specs = [
        pl.BlockSpec((1, C, s_tile, 128), lambda b, r: (b, 0, r, 0)),
        pl.BlockSpec((1, C, s_tile, 128), lambda b, r: (b, 0, r, 0)),
    ]

    if reduction == 'none':
        out_bytes = B * Rp * 128 * jnp.dtype(out_dtype).itemsize
        out4 = pl.pallas_call(
            _xent_map_kernel,
            out_shape=jax.ShapeDtypeStruct((B, Rp, 128), out_dtype),
            grid_spec=pltpu.PrefetchScalarGridSpec(
                num_scalar_prefetch=0,
                grid=grid,
                in_specs=in_specs,
                out_specs=pl.BlockSpec((1, s_tile, 128), lambda b, r: (b, r, 0)),
            ),
            compiler_params=pltpu.CompilerParams(
                dimension_semantics=("parallel", "parallel"),
                vmem_limit_bytes=int(budget),
            ),
            cost_estimate=pl.CostEstimate(
                flops=int(5 * elems),
                transcendentals=int(elems),
                bytes_accessed=int(2 * elems * in_bytes + out_bytes),
            ),
        )(p4, q4)

        xent = out4.reshape(B, Lp)[:, :L]
        return xent.reshape(shape[:dim] + shape[dim + 1:])

    # Fused mean / sum: never materialize the full xent map in HBM.
    out_bytes = B * 128 * 4
    partial = pl.pallas_call(
        _xent_sum_kernel,
        out_shape=jax.ShapeDtypeStruct((B, 1, 128), jnp.float32),
        grid_spec=pltpu.PrefetchScalarGridSpec(
            num_scalar_prefetch=0,
            grid=grid,
            in_specs=in_specs,
            out_specs=pl.BlockSpec((1, 1, 128), lambda b, r: (b, 0, 0)),
        ),
        compiler_params=pltpu.CompilerParams(
            dimension_semantics=("parallel", "arbitrary"),
            vmem_limit_bytes=int(budget),
        ),
        cost_estimate=pl.CostEstimate(
            flops=int(5 * elems),
            transcendentals=int(elems),
            bytes_accessed=int(2 * elems * in_bytes + out_bytes),
        ),
    )(p4, q4)

    total = jnp.sum(partial, dtype=jnp.float32)
    if reduction == 'sum':
        return total.astype(out_dtype)
    count = B * L                                       # elements of the reduced xent map
    return (total / count).astype(out_dtype)


# ----------------------------------------------------------------------------- reference

def soft_prob_cross_entropy_ref(target_probs, query_probs, dim=1, reduction='mean'):
    # Pure-JAX mirror of the torch reference.
    p = target_probs + _EPS
    q = query_probs + _EPS
    xent = jnp.log(q ** (-p))
    xent = jnp.sum(xent, axis=dim)
    if reduction == 'mean':
        return jnp.mean(xent)
    elif reduction == 'sum':
        return jnp.sum(xent)
    return xent


if __name__ == "__main__":
    key = jax.random.PRNGKey(0)
    k1, k2 = jax.random.split(key)
    N, C, H, W = 2, 4, 16, 16  # small NCHW probability maps
    target_probs = jax.nn.softmax(
        jax.random.normal(k1, (N, C, H, W), dtype=jnp.float32), axis=1)
    query_probs = jax.nn.softmax(
        jax.random.normal(k2, (N, C, H, W), dtype=jnp.float32), axis=1)

    out_none = jax.block_until_ready(
        soft_prob_cross_entropy(target_probs, query_probs, dim=1, reduction='none'))
    out_mean = jax.block_until_ready(
        soft_prob_cross_entropy(target_probs, query_probs, dim=1, reduction='mean'))
    out_sum = jax.block_until_ready(
        soft_prob_cross_entropy(target_probs, query_probs, dim=1, reduction='sum'))

    ref_none = soft_prob_cross_entropy_ref(target_probs, query_probs, dim=1, reduction='none')
    ref_mean = soft_prob_cross_entropy_ref(target_probs, query_probs, dim=1, reduction='mean')
    ref_sum = soft_prob_cross_entropy_ref(target_probs, query_probs, dim=1, reduction='sum')

    assert out_none.shape == (N, H, W), out_none.shape
    assert jnp.allclose(out_none, ref_none, atol=1e-4, rtol=1e-5), (
        float(jnp.max(jnp.abs(out_none - ref_none))))
    assert jnp.allclose(out_mean, ref_mean, atol=1e-4, rtol=1e-5), (
        float(jnp.abs(out_mean - ref_mean)))
    assert jnp.allclose(out_sum, ref_sum, atol=1e-3, rtol=1e-5), (
        float(jnp.abs(out_sum - ref_sum)))
    print("KERNEL_OK")
</pallas_src>

<mosaic_0001>
module attributes {stable_mosaic.version = 11 : i64} {
  func.func @_xent_map_kernel(%arg0: i32, %arg1: i32, %arg2: memref<1x4x2x128xf32, #tpu.memory_space<vmem>>, %arg3: memref<1x4x2x128xf32, #tpu.memory_space<vmem>>, %arg4: memref<1x2x128xf32, #tpu.memory_space<vmem>>) attributes {dimension_semantics = [#tpu.dimension_semantics<parallel>, #tpu.dimension_semantics<parallel>], iteration_bounds = array<i64: 2, 1>, scalar_prefetch = 0 : i64, scratch_operands = 0 : i64, tpu.core_type = #tpu.core_type<tc>, window_params = [{transform_indices = @transform_0, window_bounds = array<i64: 1, 4, 2, 128>}, {transform_indices = @transform_1, window_bounds = array<i64: 1, 4, 2, 128>}, {transform_indices = @transform_2, window_bounds = array<i64: 1, 2, 128>}]} {
    %c0 = arith.constant 0 : index
    %c0_0 = arith.constant 0 : index
    %c0_1 = arith.constant 0 : index
    %c0_2 = arith.constant 0 : index
    %0 = vector.load %arg2[%c0, %c0_0, %c0_1, %c0_2] : memref<1x4x2x128xf32, #tpu.memory_space<vmem>>, vector<1x4x2x128xf32>
    %c0_3 = arith.constant 0 : index
    %c0_4 = arith.constant 0 : index
    %c0_5 = arith.constant 0 : index
    %c0_6 = arith.constant 0 : index
    %1 = vector.load %arg3[%c0_3, %c0_4, %c0_5, %c0_6] : memref<1x4x2x128xf32, #tpu.memory_space<vmem>>, vector<1x4x2x128xf32>
    %cst = arith.constant 1.000000e-07 : f32
    %2 = vector.broadcast %cst : f32 to vector<1x4x2x128xf32>
    %3 = arith.addf %0, %2 : vector<1x4x2x128xf32>
    %cst_7 = arith.constant 1.000000e-07 : f32
    %4 = vector.broadcast %cst_7 : f32 to vector<1x4x2x128xf32>
    %5 = arith.addf %1, %4 : vector<1x4x2x128xf32>
    %cst_8 = arith.constant 0.000000e+00 : f32
    %6 = vector.broadcast %cst_8 : f32 to vector<1x4x2x128xf32>
    %7 = arith.subf %6, %3 : vector<1x4x2x128xf32>
    %8 = math.log %5 : vector<1x4x2x128xf32>
    %9 = arith.mulf %7, %8 : vector<1x4x2x128xf32>
    %cst_9 = arith.constant dense<0.000000e+00> : vector<1x2x128xf32>
    %10 = vector.multi_reduction <add>, %9, %cst_9 [1] : vector<1x4x2x128xf32> to vector<1x2x128xf32>
    %c0_10 = arith.constant 0 : index
    %c0_11 = arith.constant 0 : index
    %c0_12 = arith.constant 0 : index
    %11 = vector.load %arg4[%c0_10, %c0_11, %c0_12] : memref<1x2x128xf32, #tpu.memory_space<vmem>>, vector<1x2x128xf32>
    tpu.vector_store %arg4[%c0_10, %c0_11, %c0_12], %10 {strides = array<i32>} : memref<1x2x128xf32, #tpu.memory_space<vmem>>, vector<1x2x128xf32>,
    return
  }
  func.func @transform_0(%arg0: i32, %arg1: i32) -> (i32, i32, i32, i32) {
    %c0_i32 = arith.constant 0 : i32
    %c0_i32_0 = arith.constant 0 : i32
    %c0_i32_1 = arith.constant 0 : i32
    return %arg0, %c0_i32, %arg1, %c0_i32_0 : i32, i32, i32, i32
  }
  func.func @transform_1(%arg0: i32, %arg1: i32) -> (i32, i32, i32, i32) {
    %c0_i32 = arith.constant 0 : i32
    %c0_i32_0 = arith.constant 0 : i32
    %c0_i32_1 = arith.constant 0 : i32
    return %arg0, %c0_i32, %arg1, %c0_i32_0 : i32, i32, i32, i32
  }
  func.func @transform_2(%arg0: i32, %arg1: i32) -> (i32, i32, i32) {
    %c0_i32 = arith.constant 0 : i32
    %c0_i32_0 = arith.constant 0 : i32
    return %arg0, %arg1, %c0_i32 : i32, i32, i32
  }
}

</mosaic_0001>

<llo_original>
// kernel: tpu_custom_call.1
$region0: #{tpu_custom_call.1}
  #allocation0 [shape = 'u32[]', space=smem, size = 0x4, offset = 0x4, fixed_abs, tag = 'smem constant byte address 0x4 - core index']
  #allocation1 [shape = 'u32[144,128]{1,0:T(1,128)}', space=vmem, size = 0x12000, scoped, tag = 'internal scratch']
  %s0 = inlined_call_operand.hbm [shape: f32[2,4,2,128], index: 0, kind: input, shape index: {}]
  %s1 = inlined_call_operand.hbm [shape: f32[2,4,2,128], index: 1, kind: input, shape index: {}]
  %s2 = inlined_call_operand.hbm [shape: f32[2,2,128], index: 2, kind: output, shape index: {}]
  %s3 = sld [smem:[#allocation0]]
  $region49: #{tpu_custom_call.1} parent=0
    _
  %s5 = ssub.s32 1, %s3
  %s6 = scalar_select 0, %s5, %s3
  $region1: #{tpu_custom_call.1} parent=0
    #allocation2 [shape = 'u8[8192]{0}', space=vmem, size = 0x2000, scoped, tag = 'input window, operand 0']
    #allocation3 [shape = 's32[2]{0}', space=sflag, size = 0x8, scoped, tag = 'scoped memory for tpu_custom_call.1']
    #allocation4 [shape = 's32[2]{0}', space=sflag, size = 0x8, scoped, tag = 'scoped memory for tpu_custom_call.1']
    #allocation5 [shape = 'u8[8192]{0}', space=vmem, size = 0x2000, scoped, tag = 'input window, operand 1']
    #allocation6 [shape = 's32[2]{0}', space=sflag, size = 0x8, scoped, tag = 'scoped memory for tpu_custom_call.1']
    #allocation7 [shape = 'u8[2048]{0}', space=vmem, size = 0x800, scoped, tag = 'output window, operand 0']
    %7 = vsyncpa [#allocation3], 0
    %s8 = scalar_lea.sflag [#allocation3], 1
    %9 = vsyncpa %s8, 0
    %10 = vsyncpa [#allocation6], 0
    %s11 = scalar_lea.sflag [#allocation6], 1
    %12 = vsyncpa %s11, 0
    %13 = vsyncpa [#allocation4], 0
    %s14 = scalar_lea.sflag [#allocation4], 1
    %15 = vsyncpa %s14, 0
    loop: start=0, step=1, limit=4
    $region2: #{tpu_custom_call.1} parent=1 // loop_pre_header
      _
    $region3: #{tpu_custom_call.1} parent=1 // loop_header
      %s17 = sphi 0, %s21
      %p18 = scmp.ge.s32.totalorder %s17, 4
      %s24 = sphi 0, %s36
      %s25 = sphi 0, %s32
      %s26 = sphi 0, %s24
      %s27 = sphi 0, %s25
      %s28 = sphi 0, %s26
      %s29 = sphi 0, %s27
      %s41 = sphi 0, %s43
      %s44 = sphi 0, %s41
      %s45 = sphi 0, %s44
      %s61 = sphi 0, %s45
      %s69 = sphi 0, %s71
      %s72 = sphi 0, %s69
      %s73 = sphi 0, %s72
      %s89 = sphi 0, %s73
      %s97 = sphi 0, %s99
      %s100 = sphi 0, %s97
      %s101 = sphi 0, %s100
      %s117 = sphi 0, %s101
    $region4: #{tpu_custom_call.1} parent=1 // loop_header_branch
      %20 = sbr.rel (%p18) target = $region8
    $region5: #{tpu_custom_call.1} parent=1 // loop_body
      %s22 = ssub.s32 %s17, 1
      %s23 = ssub.s32 %s17, 2
      %s30 = sadd.s32 1, %s25
      %p31 = scmp.ge.s32.totalorder %s30, 1
      %s32 = scalar_select %p31, 0, %s30
      %s33 = sadd.s32 1, %s24
      %s34 = scalar_select %p31, %s33, %s24
      %p35 = scmp.ge.s32.totalorder %s34, 2
      %s36 = scalar_select %p35, 0, %s34
      %s37 = ssub.s32 %s24, %s36
      %s38 = ssub.s32 %s25, %s32
      %s39 = sor.u32 %s37, %s38
      %p40 = scmp.eq.s32.totalorder %s39, 0
      %s42 = sadd.s32 %s41, 1
      %s43 = scalar_select %p40, %s41, %s42
      %p46 = pneg %p40
      %p47 = scmp.eq.s32.totalorder %s17, 1
      %p48 = por %p46, %p47
      %p49 = scmp.ne.s32.totalorder %s41, %s44
      %p50 = scmp.eq.s32.totalorder %s17, 0
      %p51 = por %p49, %p50
      %p52 = scmp.ne.s32.totalorder %s41, %s44
      %p53 = scmp.eq.s32.totalorder %s22, 1
      %p54 = por %p52, %p53
      %p55 = scmp.ne.s32.totalorder %s44, %s45
      %p56 = scmp.eq.s32.totalorder %s22, 0
      %p57 = por %p55, %p56
      %p58 = scmp.ne.s32.totalorder %s44, %s45
      %p59 = scmp.eq.s32.totalorder %s23, 1
      %p60 = por %p58, %p59
      %p62 = scmp.ne.s32.totalorder %s45, %s61
      %p63 = scmp.eq.s32.totalorder %s23, 0
      %p64 = por %p62, %p63
      %s65 = ssub.s32 %s24, %s36
      %s66 = ssub.s32 %s25, %s32
      %s67 = sor.u32 %s65, %s66
      %p68 = scmp.eq.s32.totalorder %s67, 0
      %s70 = sadd.s32 %s69, 1
      %s71 = scalar_select %p68, %s69, %s70
      %p74 = pneg %p68
      %p75 = scmp.eq.s32.totalorder %s17, 1
      %p76 = por %p74, %p75
      %p77 = scmp.ne.s32.totalorder %s69, %s72
      %p78 = scmp.eq.s32.totalorder %s17, 0
      %p79 = por %p77, %p78
      %p80 = scmp.ne.s32.totalorder %s69, %s72
      %p81 = scmp.eq.s32.totalorder %s22, 1
      %p82 = por %p80, %p81
      %p83 = scmp.ne.s32.totalorder %s72, %s73
      %p84 = scmp.eq.s32.totalorder %s22, 0
      %p85 = por %p83, %p84
      %p86 = scmp.ne.s32.totalorder %s72, %s73
      %p87 = scmp.eq.s32.totalorder %s23, 1
      %p88 = por %p86, %p87
      %p90 = scmp.ne.s32.totalorder %s73, %s89
      %p91 = scmp.eq.s32.totalorder %s23, 0
      %p92 = por %p90, %p91
      %s93 = ssub.s32 %s24, %s36
      %s94 = ssub.s32 %s25, %s32
      %s95 = sor.u32 %s93, %s94
      %p96 = scmp.eq.s32.totalorder %s95, 0
      %s98 = sadd.s32 %s97, 1
      %s99 = scalar_select %p96, %s97, %s98
      %p102 = pneg %p96
      %p103 = scmp.eq.s32.totalorder %s17, 1
      %p104 = por %p102, %p103
      %p105 = scmp.ne.s32.totalorder %s97, %s100
      %p106 = scmp.eq.s32.totalorder %s17, 0
      %p107 = por %p105, %p106
      %p108 = scmp.ne.s32.totalorder %s97, %s100
      %p109 = scmp.eq.s32.totalorder %s22, 1
      %p110 = por %p108, %p109
      %p111 = scmp.ne.s32.totalorder %s100, %s101
      %p112 = scmp.eq.s32.totalorder %s22, 0
      %p113 = por %p111, %p112
      %p114 = scmp.ne.s32.totalorder %s100, %s101
      %p115 = scmp.eq.s32.totalorder %s23, 1
      %p116 = por %p114, %p115
      %p118 = scmp.ne.s32.totalorder %s101, %s117
      %p119 = scmp.eq.s32.totalorder %s23, 0
      %p120 = por %p118, %p119
      %p121 = scmp.le.s32.totalorder 1, %s17
      %p122 = scmp.lt.s32.totalorder %s17, 3
      %p123 = pnand %p121, %p122
      %p124 = pneg %p123
      // Predicated region
      $region9: #{tpu_custom_call.1} parent=5 // pred_check
        _
      $region10: #{tpu_custom_call.1} parent=5 // pred_check_branch
        %126 = sbr.rel (%p123) target = $region12
      $region11: #{tpu_custom_call.1} parent=5 // pred_region
        %s127 = ssub.s32 %s17, 1
      $region12: #{tpu_custom_call.1} parent=5 // pred_fallthru
        _
      %p128 = scmp.lt.s32.totalorder %s17, 2
      // Predicated region
      $region13: #{tpu_custom_call.1} parent=5 // pred_check
        %p129 = pneg %p128
      $region14: #{tpu_custom_call.1} parent=5 // pred_check_branch
        %131 = sbr.rel (%p129) target = $region16
      $region15: #{tpu_custom_call.1} parent=5 // pred_region
        // Predicated region
        $region17: #{tpu_custom_call.1} parent=15 // pred_check
          %p132 = pneg %p51
        $region18: #{tpu_custom_call.1} parent=15 // pred_check_branch
          %134 = sbr.rel (%p132) target = $region20
        $region19: #{tpu_custom_call.1} parent=15 // pred_region
          %s135 = sand.u32 %s41, 1
          %s136 = scalar_lea.sflag [#allocation3], %s135
          %s137 = sand.u32 %s41, 1
          %s138 = smul.addr %s137, 8
          %s139 = scalar_lea.vmem [#allocation2], %s138
          %s141 = ssub.s32 128, 128
          %142 = vsyncadd %s136, %s141
          %s143 = smul.addr %s24, 4
          %s144 = sadd.s32 %s25, %s143
          %s145 = smul.addr %s144, 32
          %s146 = scalar_lea.hbm %s0, %s145
          %s147 = sshll.u32 %s139, 4
          %s148 = int_to_ptr.vmem [resolvable:$true] %s147
          %153 = dma.hbm_to_vmem [thread:$0]  %s146, 128, %s148, %s136, 32, 32, 2
        $region20: #{tpu_custom_call.1} parent=15 // pred_fallthru
          _
        // Predicated region
        $region21: #{tpu_custom_call.1} parent=15 // pred_check
          %p154 = pneg %p79
        $region22: #{tpu_custom_call.1} parent=15 // pred_check_branch
          %156 = sbr.rel (%p154) target = $region24
        $region23: #{tpu_custom_call.1} parent=15 // pred_region
          %s157 = sand.u32 %s69, 1
          %s158 = scalar_lea.sflag [#allocation6], %s157
          %s159 = sand.u32 %s69, 1
          %s160 = smul.addr %s159, 8
          %s161 = scalar_lea.vmem [#allocation5], %s160
          %s163 = ssub.s32 128, 128
          %164 = vsyncadd %s158, %s163
          %s165 = smul.addr %s24, 4
          %s166 = sadd.s32 %s25, %s165
          %s167 = smul.addr %s166, 32
          %s168 = scalar_lea.hbm %s1, %s167
          %s169 = sshll.u32 %s161, 4
          %s170 = int_to_ptr.vmem [resolvable:$true] %s169
          %175 = dma.hbm_to_vmem [thread:$0]  %s168, 128, %s170, %s158, 32, 32, 2
        $region24: #{tpu_custom_call.1} parent=15 // pred_fallthru
          _
      $region16: #{tpu_custom_call.1} parent=5 // pred_fallthru
        _
      %p176 = scmp.le.s32.totalorder 1, %s17
      %p177 = scmp.lt.s32.totalorder %s17, 3
      %p178 = pnand %p176, %p177
      %p179 = pneg %p178
      // Predicated region
      $region25: #{tpu_custom_call.1} parent=5 // pred_check
        _
      $region26: #{tpu_custom_call.1} parent=5 // pred_check_branch
        %181 = sbr.rel (%p178) target = $region28
      $region27: #{tpu_custom_call.1} parent=5 // pred_region
        %s182 = ssub.s32 %s17, 1
        %s183 = sand.u32 %s44, 1
        %s184 = scalar_lea.sflag [#allocation3], %s183
        %s185 = sand.u32 %s44, 1
        %s186 = smul.addr %s185, 8
        %s187 = scalar_lea.vmem [#allocation2], %s186
        // Predicated region
        $region29: #{tpu_custom_call.1} parent=27 // pred_check
          %p188 = pneg %p57
        $region30: #{tpu_custom_call.1} parent=27 // pred_check_branch
          %190 = sbr.rel (%p188) target = $region32
        $region31: #{tpu_custom_call.1} parent=27 // pred_region
          %191 = dma.done %s184, 128
        $region32: #{tpu_custom_call.1} parent=27 // pred_fallthru
          _
        %s192 = sand.u32 %s72, 1
        %s193 = scalar_lea.sflag [#allocation6], %s192
        %s194 = sand.u32 %s72, 1
        %s195 = smul.addr %s194, 8
        %s196 = scalar_lea.vmem [#allocation5], %s195
        // Predicated region
        $region33: #{tpu_custom_call.1} parent=27 // pred_check
          %p197 = pneg %p85
        $region34: #{tpu_custom_call.1} parent=27 // pred_check_branch
          %199 = sbr.rel (%p197) target = $region36
        $region35: #{tpu_custom_call.1} parent=27 // pred_region
          %200 = dma.done %s193, 128
        $region36: #{tpu_custom_call.1} parent=27 // pred_fallthru
          _
        %s201 = sand.u32 %s44, 1
        %s202 = scalar_lea.sflag [#allocation3], %s201
        %s203 = sand.u32 %s44, 1
        %s204 = smul.addr %s203, 8
        %s205 = scalar_lea.vmem [#allocation2], %s204
        %p206 = pneg %p57
        %p207 = pneg %p54
        %s208 = sand.u32 %s72, 1
        %s209 = scalar_lea.sflag [#allocation6], %s208
        %s210 = sand.u32 %s72, 1
        %s211 = smul.addr %s210, 8
        %s212 = scalar_lea.vmem [#allocation5], %s211
        %p213 = pneg %p85
        %p214 = pneg %p82
        %p215 = pneg %p113
        %p216 = pneg %p110
        %s217 = sand.u32 %s100, 1
        %s218 = scalar_lea.sflag [#allocation4], %s217
        %s219 = sand.u32 %s100, 1
        %s220 = smul.addr %s219, 2
        %s221 = scalar_lea.vmem [#allocation7], %s220
        %v222 = vld [vmem:[%s187] sm:$0x3]
        %v223 = vld [vmem:[%s187 + $0x2] sm:$0x3]
        %v224 = vld [vmem:[%s187 + $0x4] sm:$0x3]
        %v225 = vld [vmem:[%s187 + $0x6] sm:$0x3]
        %v226 = vld [vmem:[%s196] sm:$0x3]
        %v227 = vld [vmem:[%s196 + $0x2] sm:$0x3]
        %v228 = vld [vmem:[%s196 + $0x4] sm:$0x3]
        %v229 = vld [vmem:[%s196 + $0x6] sm:$0x3]
        %v230 = vadd.f32 %v222, 1e-07
        %v231 = vadd.f32 %v223, 1e-07
        %v232 = vadd.f32 %v224, 1e-07
        %v233 = vadd.f32 %v225, 1e-07
        %v234 = vadd.f32 %v226, 1e-07
        %v235 = vadd.f32 %v227, 1e-07
        %v236 = vadd.f32 %v228, 1e-07
        %v237 = vadd.f32 %v229, 1e-07
        %v238 = vsub.f32 0.0, %v230
        %v239 = vsub.f32 0.0, %v231
        %v240 = vsub.f32 0.0, %v232
        %v241 = vsub.f32 0.0, %v233
        %v242 = vlog2.pop %v234
        %v243 = vmul.f32 %v242, 0.6931472
        %v244 = vlog2.pop %v235
        %v245 = vmul.f32 %v244, 0.6931472
        %v246 = vlog2.pop %v236
        %v247 = vmul.f32 %v246, 0.6931472
        %v248 = vlog2.pop %v237
        %v249 = vmul.f32 %v248, 0.6931472
        %v250 = vmul.f32 %v238, %v243
        %v251 = vmul.f32 %v239, %v245
        %v252 = vmul.f32 %v240, %v247
        %v253 = vmul.f32 %v241, %v249
        %vm254 = vcmask 1041408
        %v255 = vsel %vm254, %v250, 0.0
        %v256 = vsel %vm254, %v251, 0.0
        %v257 = vadd.f32 %v255, %v256
        %v258 = vsel %vm254, %v252, 0.0
        %v259 = vadd.f32 %v257, %v258
        %v260 = vsel %vm254, %v253, 0.0
        %v261 = vadd.f32 %v259, %v260
        %262 = vst [vmem:[%s221] sm:$0x3] %v261
        %s263 = sand.u32 %s100, 1
        %s264 = scalar_lea.sflag [#allocation4], %s263
        %s265 = sand.u32 %s100, 1
        %s266 = smul.addr %s265, 2
        %s267 = scalar_lea.vmem [#allocation7], %s266
        // Predicated region
        $region37: #{tpu_custom_call.1} parent=27 // pred_check
          %p268 = pneg %p110
        $region38: #{tpu_custom_call.1} parent=27 // pred_check_branch
          %270 = sbr.rel (%p268) target = $region40
        $region39: #{tpu_custom_call.1} parent=27 // pred_region
          %s272 = ssub.s32 32, 32
          %273 = vsyncadd %s264, %s272
          %s274 = sadd.s32 %s27, %s26
          %s275 = smul.addr %s274, 32
          %s276 = scalar_lea.hbm %s2, %s275
          %s278 = sshll.u32 %s267, 4
          %s279 = int_to_ptr.vmem [resolvable:$true] %s278
          %281 = dma.vmem_to_hbm [thread:$0]  %s279, 32, %s276, %s264
        $region40: #{tpu_custom_call.1} parent=27 // pred_fallthru
          _
      $region28: #{tpu_custom_call.1} parent=5 // pred_fallthru
        _
      %p282 = scmp.le.s32.totalorder 2, %s17
      // Predicated region
      $region41: #{tpu_custom_call.1} parent=5 // pred_check
        %p283 = pneg %p282
      $region42: #{tpu_custom_call.1} parent=5 // pred_check_branch
        %285 = sbr.rel (%p283) target = $region44
      $region43: #{tpu_custom_call.1} parent=5 // pred_region
        %s286 = ssub.s32 %s17, 2
        // Predicated region
        $region45: #{tpu_custom_call.1} parent=43 // pred_check
          %p287 = pneg %p116
        $region46: #{tpu_custom_call.1} parent=43 // pred_check_branch
          %289 = sbr.rel (%p287) target = $region48
        $region47: #{tpu_custom_call.1} parent=43 // pred_region
          %s290 = sand.u32 %s101, 1
          %s291 = scalar_lea.sflag [#allocation4], %s290
          %s292 = sand.u32 %s101, 1
          %s293 = smul.addr %s292, 2
          %s294 = scalar_lea.vmem [#allocation7], %s293
          %295 = dma.done %s291, 32
        $region48: #{tpu_custom_call.1} parent=43 // pred_fallthru
          _
      $region44: #{tpu_custom_call.1} parent=5 // pred_fallthru
        _
    $region6: #{tpu_custom_call.1} parent=1 // loop_footer
      %s21 = sadd.s32 1, %s17
    $region7: #{tpu_custom_call.1} parent=1 // loop_footer_branch
      %16 = sbr.rel target = $region3
    $region8: #{tpu_custom_call.1} parent=1 // loop_exit
      _
    %296 = vsyncpa [#allocation3], 1
    %s297 = scalar_lea.sflag [#allocation3], 1
    %298 = vsyncpa %s297, 1
    %299 = vsyncpa [#allocation6], 1
    %s300 = scalar_lea.sflag [#allocation6], 1
    %301 = vsyncpa %s300, 1
    %302 = vsyncpa [#allocation4], 1
    %s303 = scalar_lea.sflag [#allocation4], 1
    %304 = vsyncpa %s303, 1

</llo_original>
